<compile_context>
chip_gen: v7x
topology: tpu7x:2x2x1
jax: 0.10.0
libtpu: 0.0.40
codegen_flags: <defaults>
</compile_context>

<pallas_src>
import functools

import jax
import jax.numpy as jnp
from jax.experimental import pallas as pl
from jax.experimental.pallas import tpu as pltpu

LANE = 128


def _round_up(n, m):
    return ((n + m - 1) // m) * m


def _tif_kernel(x_ref, w1_ref, w2_ref, o_ref, *, bn_units, f, eps, compute_dtype):
    """Fused TIF for ONE channel: Linear1 -> BN(train) -> ReLU -> Linear2 -> BN -> ReLU.

    x_ref : (B, T, Fp)   input slab for this channel, zero-padded along lanes (Fp = 128k)
    w1_ref: (Fp, Up)     Linear(f, bn_units).weight.T, zero-padded
    w2_ref: (Up, Fp)     Linear(bn_units, f).weight.T, zero-padded
    o_ref : (B, T, Fp)   padded output (real data in the first `f` lanes)
    """
    B, T, Fp = x_ref.shape
    M = B * T

    x = x_ref[...].reshape(M, Fp)          # merge leading dims; layout-preserving reshape
    w1 = w1_ref[...]
    w2 = w2_ref[...]
    if compute_dtype != jnp.float32:       # optional bf16 MXU path (v5e/v6e)
        x = x.astype(compute_dtype)
        w1 = w1.astype(compute_dtype)
        w2 = w2.astype(compute_dtype)

    # ---- Linear(f -> bn_units): padded lanes of x / padded rows of w1 contribute zero.
    h = jnp.dot(x, w1, preferred_element_type=jnp.float32)          # (M, Up) f32

    # ---- BatchNorm2d (training mode, affine=False) over this channel's (B, T, bn_units).
    # Padded lanes of h are exactly zero, so sums over the padded width are exact;
    # divide by the true element count.  Biased variance, as PyTorch uses for the
    # normalization itself.
    cnt1 = float(M * bn_units)
    s1 = jnp.sum(jnp.sum(h, axis=1, keepdims=True), axis=0, keepdims=True)      # (1, 1)
    q1 = jnp.sum(jnp.sum(h * h, axis=1, keepdims=True), axis=0, keepdims=True)  # (1, 1)
    mean1 = s1 / cnt1
    var1 = q1 / cnt1 - mean1 * mean1
    h = jnp.maximum((h - mean1) * jax.lax.rsqrt(var1 + eps), 0.0)

    # Padded lanes of h are now a (possibly nonzero) constant, but the matching rows of
    # w2 are zero, so they cannot contaminate the second matmul.
    if compute_dtype != jnp.float32:
        h = h.astype(compute_dtype)
    z = jnp.dot(h, w2, preferred_element_type=jnp.float32)          # (M, Fp); padded lanes == 0

    cnt2 = float(M * f)
    s2 = jnp.sum(jnp.sum(z, axis=1, keepdims=True), axis=0, keepdims=True)
    q2 = jnp.sum(jnp.sum(z * z, axis=1, keepdims=True), axis=0, keepdims=True)
    mean2 = s2 / cnt2
    var2 = q2 / cnt2 - mean2 * mean2
    z = jnp.maximum((z - mean2) * jax.lax.rsqrt(var2 + eps), 0.0)

    o_ref[...] = z.reshape(B, T, Fp)       # lane-dense (128-wide), unmasked store


def tif_forward(x, w1, w2, *, eps=1e-5, compute_dtype=jnp.float32):
    """TIF forward.  x: (B, C, T, F) f32; w1: (bn_units, F); w2: (F, bn_units)."""
    B, C, T, F = x.shape
    bn_units = w1.shape[0]
    assert w1.shape == (bn_units, F), w1.shape
    assert w2.shape == (F, bn_units), w2.shape

    Fp = _round_up(F, LANE)
    Up = _round_up(bn_units, LANE)

    # Zero-pad once so the MXU sees full 128-wide tiles and every store is unmasked.
    xp = jnp.pad(x.astype(jnp.float32), ((0, 0), (0, 0), (0, 0), (0, Fp - F)))
    w1p = jnp.pad(w1.T.astype(jnp.float32), ((0, Fp - F), (0, Up - bn_units)))
    w2p = jnp.pad(w2.T.astype(jnp.float32), ((0, Up - bn_units), (0, Fp - F)))

    kernel = functools.partial(_tif_kernel, bn_units=bn_units, f=F, eps=eps,
                               compute_dtype=compute_dtype)

    out_p = pl.pallas_call(
        kernel,
        out_shape=jax.ShapeDtypeStruct((B, C, T, Fp), jnp.float32),
        grid_spec=pltpu.PrefetchScalarGridSpec(
            num_scalar_prefetch=0,
            grid=(C,),                                            # one grid step per channel
            in_specs=[
                pl.BlockSpec((B, None, T, Fp), lambda c: (0, c, 0, 0)),
                pl.BlockSpec((Fp, Up), lambda c: (0, 0)),
                pl.BlockSpec((Up, Fp), lambda c: (0, 0)),
            ],
            out_specs=pl.BlockSpec((B, None, T, Fp), lambda c: (0, c, 0, 0)),
        ),
        compiler_params=pltpu.CompilerParams(
            dimension_semantics=("parallel",),                    # shard channels across TCs (v7x)
        ),
    )(xp, w1p, w2p)

    return out_p[..., :F]


def tif_reference(x, w1, w2, eps=1e-5):
    """Pure-JAX reference: Linear -> BatchNorm2d(train, affine=False) -> ReLU, twice."""
    def bn_relu(v):
        mean = jnp.mean(v, axis=(0, 2, 3), keepdims=True)
        var = jnp.mean(jnp.square(v - mean), axis=(0, 2, 3), keepdims=True)
        return jnp.maximum((v - mean) * jax.lax.rsqrt(var + eps), 0.0)

    h = bn_relu(jnp.einsum('bctf,uf->bctu', x, w1))
    return bn_relu(jnp.einsum('bctu,fu->bctf', h, w2))


if __name__ == "__main__":
    # Small config matching the module defaults:
    #   TIF(channels=4, f=32, bn_factor=16, bias=False, min_bn_units=16)
    #   => bn_units = max(32 // 16, 16) = 16
    B, C, T, F = 2, 4, 8, 32
    bn_units = max(F // 16, 16)

    key = jax.random.PRNGKey(0)
    kx, k1, k2 = jax.random.split(key, 3)
    x = jax.random.normal(kx, (B, C, T, F), dtype=jnp.float32)
    w1 = 0.1 * jax.random.normal(k1, (bn_units, F), dtype=jnp.float32)  # Linear(F, bn_units).weight
    w2 = 0.1 * jax.random.normal(k2, (F, bn_units), dtype=jnp.float32)  # Linear(bn_units, F).weight

    fwd = jax.jit(tif_forward)
    out = fwd(x, w1, w2)
    jax.block_until_ready(out)

    assert out.shape == (B, C, T, F), out.shape
    assert bool(jnp.all(jnp.isfinite(out)))

    ref = tif_reference(x, w1, w2)
    err = float(jnp.max(jnp.abs(out - ref)))
    assert err < 1e-3, f"max abs error vs reference: {err}"

    print("KERNEL_OK")
</pallas_src>

<mosaic_0001>
module attributes {stable_mosaic.version = 11 : i64} {
  func.func @_tif_kernel(%arg0: i32, %arg1: memref<2x1x8x128xf32, #tpu.memory_space<vmem>>, %arg2: memref<128x128xf32, #tpu.memory_space<vmem>>, %arg3: memref<128x128xf32, #tpu.memory_space<vmem>>, %arg4: memref<2x1x8x128xf32, #tpu.memory_space<vmem>>) attributes {dimension_semantics = [#tpu.dimension_semantics<parallel>], iteration_bounds = array<i64: 4>, scalar_prefetch = 0 : i64, scratch_operands = 0 : i64, tpu.core_type = #tpu.core_type<tc>, window_params = [{transform_indices = @transform_0, window_bounds = array<i64: 2, 1, 8, 128>}, {pipeline_mode = #tpu.pipeline_mode<synchronous>, transform_indices = @transform_1, window_bounds = array<i64: 128, 128>}, {pipeline_mode = #tpu.pipeline_mode<synchronous>, transform_indices = @transform_2, window_bounds = array<i64: 128, 128>}, {transform_indices = @transform_3, window_bounds = array<i64: 2, 1, 8, 128>}]} {
    %c0 = arith.constant 0 : index
    %c0_0 = arith.constant 0 : index
    %c0_1 = arith.constant 0 : index
    %c0_2 = arith.constant 0 : index
    %0 = vector.load %arg1[%c0, %c0_0, %c0_1, %c0_2] : memref<2x1x8x128xf32, #tpu.memory_space<vmem>>, vector<2x1x8x128xf32>
    %1 = vector.shape_cast %0 : vector<2x1x8x128xf32> to vector<2x8x128xf32>
    %2 = vector.shape_cast %1 : vector<2x8x128xf32> to vector<16x128xf32>
    %c0_3 = arith.constant 0 : index
    %c0_4 = arith.constant 0 : index
    %3 = vector.load %arg2[%c0_3, %c0_4] : memref<128x128xf32, #tpu.memory_space<vmem>>, vector<128x128xf32>
    %c0_5 = arith.constant 0 : index
    %c0_6 = arith.constant 0 : index
    %4 = vector.load %arg3[%c0_5, %c0_6] : memref<128x128xf32, #tpu.memory_space<vmem>>, vector<128x128xf32>
    %cst = arith.constant dense<0.000000e+00> : vector<16x128xf32>
    %5 = tpu.matmul %2, %3, %cst {dimension_numbers = #tpu.dot_dimension_numbers<[1], [0], [0], [1], [0, 0, 1, 1], [], []>} : vector<16x128xf32>, vector<128x128xf32>, vector<16x128xf32> -> vector<16x128xf32>
    %cst_7 = arith.constant dense<0.000000e+00> : vector<16xf32>
    %6 = vector.multi_reduction <add>, %5, %cst_7 [1] : vector<16x128xf32> to vector<16xf32>
    %7 = vector.shape_cast %6 : vector<16xf32> to vector<16x1xf32>
    %cst_8 = arith.constant dense<0.000000e+00> : vector<1xf32>
    %8 = vector.multi_reduction <add>, %7, %cst_8 [0] : vector<16x1xf32> to vector<1xf32>
    %9 = vector.shape_cast %8 : vector<1xf32> to vector<1x1xf32>
    %10 = arith.mulf %5, %5 : vector<16x128xf32>
    %cst_9 = arith.constant dense<0.000000e+00> : vector<16xf32>
    %11 = vector.multi_reduction <add>, %10, %cst_9 [1] : vector<16x128xf32> to vector<16xf32>
    %12 = vector.shape_cast %11 : vector<16xf32> to vector<16x1xf32>
    %cst_10 = arith.constant dense<0.000000e+00> : vector<1xf32>
    %13 = vector.multi_reduction <add>, %12, %cst_10 [0] : vector<16x1xf32> to vector<1xf32>
    %14 = vector.shape_cast %13 : vector<1xf32> to vector<1x1xf32>
    %cst_11 = arith.constant 2.560000e+02 : f32
    %15 = vector.broadcast %cst_11 : f32 to vector<1x1xf32>
    %16 = arith.divf %9, %15 : vector<1x1xf32>
    %cst_12 = arith.constant 2.560000e+02 : f32
    %17 = vector.broadcast %cst_12 : f32 to vector<1x1xf32>
    %18 = arith.divf %14, %17 : vector<1x1xf32>
    %19 = arith.mulf %16, %16 : vector<1x1xf32>
    %20 = arith.subf %18, %19 : vector<1x1xf32>
    %21 = vector.broadcast %16 : vector<1x1xf32> to vector<16x128xf32>
    %22 = arith.subf %5, %21 : vector<16x128xf32>
    %cst_13 = arith.constant 9.99999974E-6 : f32
    %23 = vector.broadcast %cst_13 : f32 to vector<1x1xf32>
    %24 = arith.addf %20, %23 : vector<1x1xf32>
    %25 = math.rsqrt %24 : vector<1x1xf32>
    %26 = vector.broadcast %25 : vector<1x1xf32> to vector<16x128xf32>
    %27 = arith.mulf %22, %26 : vector<16x128xf32>
    %cst_14 = arith.constant 0.000000e+00 : f32
    %28 = vector.broadcast %cst_14 : f32 to vector<16x128xf32>
    %29 = arith.maximumf %27, %28 : vector<16x128xf32>
    %cst_15 = arith.constant dense<0.000000e+00> : vector<16x128xf32>
    %30 = tpu.matmul %29, %4, %cst_15 {dimension_numbers = #tpu.dot_dimension_numbers<[1], [0], [0], [1], [0, 0, 1, 1], [], []>} : vector<16x128xf32>, vector<128x128xf32>, vector<16x128xf32> -> vector<16x128xf32>
    %cst_16 = arith.constant dense<0.000000e+00> : vector<16xf32>
    %31 = vector.multi_reduction <add>, %30, %cst_16 [1] : vector<16x128xf32> to vector<16xf32>
    %32 = vector.shape_cast %31 : vector<16xf32> to vector<16x1xf32>
    %cst_17 = arith.constant dense<0.000000e+00> : vector<1xf32>
    %33 = vector.multi_reduction <add>, %32, %cst_17 [0] : vector<16x1xf32> to vector<1xf32>
    %34 = vector.shape_cast %33 : vector<1xf32> to vector<1x1xf32>
    %35 = arith.mulf %30, %30 : vector<16x128xf32>
    %cst_18 = arith.constant dense<0.000000e+00> : vector<16xf32>
    %36 = vector.multi_reduction <add>, %35, %cst_18 [1] : vector<16x128xf32> to vector<16xf32>
    %37 = vector.shape_cast %36 : vector<16xf32> to vector<16x1xf32>
    %cst_19 = arith.constant dense<0.000000e+00> : vector<1xf32>
    %38 = vector.multi_reduction <add>, %37, %cst_19 [0] : vector<16x1xf32> to vector<1xf32>
    %39 = vector.shape_cast %38 : vector<1xf32> to vector<1x1xf32>
    %cst_20 = arith.constant 5.120000e+02 : f32
    %40 = vector.broadcast %cst_20 : f32 to vector<1x1xf32>
    %41 = arith.divf %34, %40 : vector<1x1xf32>
    %cst_21 = arith.constant 5.120000e+02 : f32
    %42 = vector.broadcast %cst_21 : f32 to vector<1x1xf32>
    %43 = arith.divf %39, %42 : vector<1x1xf32>
    %44 = arith.mulf %41, %41 : vector<1x1xf32>
    %45 = arith.subf %43, %44 : vector<1x1xf32>
    %46 = vector.broadcast %41 : vector<1x1xf32> to vector<16x128xf32>
    %47 = arith.subf %30, %46 : vector<16x128xf32>
    %cst_22 = arith.constant 9.99999974E-6 : f32
    %48 = vector.broadcast %cst_22 : f32 to vector<1x1xf32>
    %49 = arith.addf %45, %48 : vector<1x1xf32>
    %50 = math.rsqrt %49 : vector<1x1xf32>
    %51 = vector.broadcast %50 : vector<1x1xf32> to vector<16x128xf32>
    %52 = arith.mulf %47, %51 : vector<16x128xf32>
    %cst_23 = arith.constant 0.000000e+00 : f32
    %53 = vector.broadcast %cst_23 : f32 to vector<16x128xf32>
    %54 = arith.maximumf %52, %53 : vector<16x128xf32>
    %55 = vector.shape_cast %54 : vector<16x128xf32> to vector<2x8x128xf32>
    %c0_24 = arith.constant 0 : index
    %c0_25 = arith.constant 0 : index
    %c0_26 = arith.constant 0 : index
    %c0_27 = arith.constant 0 : index
    %56 = vector.load %arg4[%c0_24, %c0_25, %c0_26, %c0_27] : memref<2x1x8x128xf32, #tpu.memory_space<vmem>>, vector<2x1x8x128xf32>
    %57 = vector.shape_cast %56 : vector<2x1x8x128xf32> to vector<2x8x128xf32>
    %58 = vector.shape_cast %55 : vector<2x8x128xf32> to vector<2x1x8x128xf32>
    tpu.vector_store %arg4[%c0_24, %c0_25, %c0_26, %c0_27], %58 {strides = array<i32>} : memref<2x1x8x128xf32, #tpu.memory_space<vmem>>, vector<2x1x8x128xf32>,
    return
  }
  func.func @transform_0(%arg0: i32) -> (i32, i32, i32, i32) {
    %c0_i32 = arith.constant 0 : i32
    %c0_i32_0 = arith.constant 0 : i32
    %c0_i32_1 = arith.constant 0 : i32
    %c0_i32_2 = arith.constant 0 : i32
    return %c0_i32, %arg0, %c0_i32_0, %c0_i32_1 : i32, i32, i32, i32
  }
  func.func @transform_1(%arg0: i32) -> (i32, i32) {
    %c0_i32 = arith.constant 0 : i32
    %c0_i32_0 = arith.constant 0 : i32
    %c0_i32_1 = arith.constant 0 : i32
    return %c0_i32, %c0_i32_0 : i32, i32
  }
  func.func @transform_2(%arg0: i32) -> (i32, i32) {
    %c0_i32 = arith.constant 0 : i32
    %c0_i32_0 = arith.constant 0 : i32
    %c0_i32_1 = arith.constant 0 : i32
    return %c0_i32, %c0_i32_0 : i32, i32
  }
  func.func @transform_3(%arg0: i32) -> (i32, i32, i32, i32) {
    %c0_i32 = arith.constant 0 : i32
    %c0_i32_0 = arith.constant 0 : i32
    %c0_i32_1 = arith.constant 0 : i32
    %c0_i32_2 = arith.constant 0 : i32
    return %c0_i32, %arg0, %c0_i32_0, %c0_i32_1 : i32, i32, i32, i32
  }
}

</mosaic_0001>

<llo_original>
// kernel: tif_forward.1
$region0: #{tif_forward.1}
  #allocation0 [shape = 'u32[]', space=smem, size = 0x4, offset = 0x4, fixed_abs, tag = 'smem constant byte address 0x4 - core index']
  #allocation1 [shape = 'u32[144,128]{1,0:T(1,128)}', space=vmem, size = 0x12000, scoped, tag = 'internal scratch']
  %s0 = inlined_call_operand.vmem [shape: f32[2,4,8,128], index: 0, kind: input, shape index: {}]
  %s1 = inlined_call_operand.vmem [shape: f32[128,128], index: 1, kind: input, shape index: {}]
  %s2 = inlined_call_operand.vmem [shape: f32[128,128], index: 2, kind: input, shape index: {}]
  %s3 = inlined_call_operand.hbm [shape: f32[2,4,8,128], index: 3, kind: output, shape index: {}]
  %s4 = sld [smem:[#allocation0]]
  $region83: #{tif_forward.1} parent=0
    _
  %s6 = ssub.s32 1, %s4
  %s7 = scalar_select 0, %s6, %s4
  $region1: #{tif_forward.1} parent=0
    #allocation2 [shape = 'u8[16384]{0}', space=vmem, size = 0x4000, scoped, tag = 'input window, operand 0']
    #allocation3 [shape = 'u8[16384]{0}', space=vmem, size = 0x4000, scoped, tag = 'output window, operand 0']
    #allocation4 [shape = 's32[2]{0}', space=sflag, size = 0x8, scoped, tag = 'scoped memory for tif_forward.1']
    %8 = vsyncpa [#allocation4], 0
    %s9 = scalar_lea.sflag [#allocation4], 1
    %10 = vsyncpa %s9, 0
    loop: start=0, step=1, limit=6
    $region2: #{tif_forward.1} parent=1 // loop_pre_header
      _
    $region3: #{tif_forward.1} parent=1 // loop_header
      %s12 = sphi 0, %s16
      %p13 = scmp.ge.s32.totalorder %s12, 6
      %s22 = sphi 0, %s24
      %s25 = sphi 0, %s22
      %s26 = sphi 0, %s25
      %s42 = sphi 0, %s26
      %s46 = sphi 0, %s46
      %s48 = sphi 0, %s46
      %s49 = sphi 0, %s48
      %s63 = sphi 0, %s49
      %s67 = sphi 0, %s67
      %s69 = sphi 0, %s67
      %s70 = sphi 0, %s69
      %s84 = sphi 0, %s70
      %s90 = sphi 0, %s92
      %s93 = sphi 0, %s90
      %s94 = sphi 0, %s93
      %s110 = sphi 0, %s94
    $region4: #{tif_forward.1} parent=1 // loop_header_branch
      %15 = sbr.rel (%p13) target = $region8
    $region5: #{tif_forward.1} parent=1 // loop_body
      %s17 = ssub.s32 %s12, 1
      %s18 = ssub.s32 %s12, 2
      %s19 = sadd.s32 %s12, 1
      %s20 = ssub.s32 %s12, %s19
      %p21 = scmp.eq.s32.totalorder %s20, 0
      %s23 = sadd.s32 %s22, 1
      %s24 = scalar_select %p21, %s22, %s23
      %p27 = pneg %p21
      %p28 = scmp.eq.s32.totalorder %s12, 3
      %p29 = por %p27, %p28
      %p30 = scmp.ne.s32.totalorder %s22, %s25
      %p31 = scmp.eq.s32.totalorder %s12, 0
      %p32 = por %p30, %p31
      %p33 = scmp.ne.s32.totalorder %s22, %s25
      %p34 = scmp.eq.s32.totalorder %s17, 3
      %p35 = por %p33, %p34
      %p36 = scmp.ne.s32.totalorder %s25, %s26
      %p37 = scmp.eq.s32.totalorder %s17, 0
      %p38 = por %p36, %p37
      %p39 = scmp.ne.s32.totalorder %s25, %s26
      %p40 = scmp.eq.s32.totalorder %s18, 3
      %p41 = por %p39, %p40
      %p43 = scmp.ne.s32.totalorder %s26, %s42
      %p44 = scmp.eq.s32.totalorder %s18, 0
      %p45 = por %p43, %p44
      %s47 = sadd.s32 %s46, 1
      %p50 = scmp.eq.s32.totalorder %s12, 3
      %p51 = scmp.ne.s32.totalorder %s46, %s48
      %p52 = scmp.eq.s32.totalorder %s12, 0
      %p53 = por %p51, %p52
      %p54 = scmp.ne.s32.totalorder %s46, %s48
      %p55 = scmp.eq.s32.totalorder %s17, 3
      %p56 = por %p54, %p55
      %p57 = scmp.ne.s32.totalorder %s48, %s49
      %p58 = scmp.eq.s32.totalorder %s17, 0
      %p59 = por %p57, %p58
      %p60 = scmp.ne.s32.totalorder %s48, %s49
      %p61 = scmp.eq.s32.totalorder %s18, 3
      %p62 = por %p60, %p61
      %p64 = scmp.ne.s32.totalorder %s49, %s63
      %p65 = scmp.eq.s32.totalorder %s18, 0
      %p66 = por %p64, %p65
      %s68 = sadd.s32 %s67, 1
      %p71 = scmp.eq.s32.totalorder %s12, 3
      %p72 = scmp.ne.s32.totalorder %s67, %s69
      %p73 = scmp.eq.s32.totalorder %s12, 0
      %p74 = por %p72, %p73
      %p75 = scmp.ne.s32.totalorder %s67, %s69
      %p76 = scmp.eq.s32.totalorder %s17, 3
      %p77 = por %p75, %p76
      %p78 = scmp.ne.s32.totalorder %s69, %s70
      %p79 = scmp.eq.s32.totalorder %s17, 0
      %p80 = por %p78, %p79
      %p81 = scmp.ne.s32.totalorder %s69, %s70
      %p82 = scmp.eq.s32.totalorder %s18, 3
      %p83 = por %p81, %p82
      %p85 = scmp.ne.s32.totalorder %s70, %s84
      %p86 = scmp.eq.s32.totalorder %s18, 0
      %p87 = por %p85, %p86
      %s88 = ssub.s32 %s12, %s19
      %p89 = scmp.eq.s32.totalorder %s88, 0
      %s91 = sadd.s32 %s90, 1
      %s92 = scalar_select %p89, %s90, %s91
      %p95 = pneg %p89
      %p96 = scmp.eq.s32.totalorder %s12, 3
      %p97 = por %p95, %p96
      %p98 = scmp.ne.s32.totalorder %s90, %s93
      %p99 = scmp.eq.s32.totalorder %s12, 0
      %p100 = por %p98, %p99
      %p101 = scmp.ne.s32.totalorder %s90, %s93
      %p102 = scmp.eq.s32.totalorder %s17, 3
      %p103 = por %p101, %p102
      %p104 = scmp.ne.s32.totalorder %s93, %s94
      %p105 = scmp.eq.s32.totalorder %s17, 0
      %p106 = por %p104, %p105
      %p107 = scmp.ne.s32.totalorder %s93, %s94
      %p108 = scmp.eq.s32.totalorder %s18, 3
      %p109 = por %p107, %p108
      %p111 = scmp.ne.s32.totalorder %s94, %s110
      %p112 = scmp.eq.s32.totalorder %s18, 0
      %p113 = por %p111, %p112
      %p114 = scmp.le.s32.totalorder 1, %s12
      %p115 = scmp.lt.s32.totalorder %s12, 5
      %p116 = pnand %p114, %p115
      %p117 = pneg %p116
      // Predicated region
      $region9: #{tif_forward.1} parent=5 // pred_check
        _
      $region10: #{tif_forward.1} parent=5 // pred_check_branch
        %119 = sbr.rel (%p116) target = $region12
      $region11: #{tif_forward.1} parent=5 // pred_region
        %s120 = ssub.s32 %s12, 1
        // Predicated region
        $region13: #{tif_forward.1} parent=11 // pred_check
          %p121 = pneg %p59
        $region14: #{tif_forward.1} parent=11 // pred_check_branch
          %123 = sbr.rel (%p121) target = $region16
        $region15: #{tif_forward.1} parent=11 // pred_region
          _
        $region16: #{tif_forward.1} parent=11 // pred_fallthru
          _
        // Predicated region
        $region17: #{tif_forward.1} parent=11 // pred_check
          %p124 = pneg %p80
        $region18: #{tif_forward.1} parent=11 // pred_check_branch
          %126 = sbr.rel (%p124) target = $region20
        $region19: #{tif_forward.1} parent=11 // pred_region
          _
        $region20: #{tif_forward.1} parent=11 // pred_fallthru
          _
      $region12: #{tif_forward.1} parent=5 // pred_fallthru
        _
      %p127 = scmp.lt.s32.totalorder %s12, 4
      // Predicated region
      $region21: #{tif_forward.1} parent=5 // pred_check
        %p128 = pneg %p127
      $region22: #{tif_forward.1} parent=5 // pred_check_branch
        %130 = sbr.rel (%p128) target = $region24
      $region23: #{tif_forward.1} parent=5 // pred_region
        // Predicated region
        $region25: #{tif_forward.1} parent=23 // pred_check
          %p131 = pneg %p32
        $region26: #{tif_forward.1} parent=23 // pred_check_branch
          %133 = sbr.rel (%p131) target = $region28
        $region27: #{tif_forward.1} parent=23 // pred_region
          %s134 = sand.u32 %s22, 1
          %s135 = sand.u32 %s22, 1
          %s136 = smul.addr %s135, 16
          %s137 = scalar_lea.vmem [#allocation2], %s136
          %s138 = smul.addr %s12, 8
          %s139 = scalar_lea.vmem %s0, %s138
          // Predicated region
          $region29: #{tif_forward.1} parent=27 // pred_check
            _
          $region30: #{tif_forward.1} parent=27 // pred_check_branch
            %141 = sbr.rel (0) target = $region32
          $region31: #{tif_forward.1} parent=27 // pred_region
            // Predicated region
            $region33: #{tif_forward.1} parent=31 // pred_check
              _
            $region34: #{tif_forward.1} parent=31 // pred_check_branch
              %143 = sbr.rel (0) target = $region36
            $region35: #{tif_forward.1} parent=31 // pred_region
              // Predicated region
              $region48: #{tif_forward.1} parent=35 // pred_check
                _
              $region49: #{tif_forward.1} parent=35 // pred_check_branch
                %160 = sbr.rel (0) target = $region51
              $region50: #{tif_forward.1} parent=35 // pred_region
                loop: start=0, step=1, limit=1
                $region52: #{tif_forward.1} parent=50 // loop_pre_header
                  _
                $region53: #{tif_forward.1} parent=50 // loop_header
                  %s162 = sphi 0, %s166
                  %p163 = scmp.ge.s32.totalorder %s162, 1
                  %s167 = sphi %s139, %s139
                  %s168 = sphi %s137, %s137
                $region54: #{tif_forward.1} parent=50 // loop_header_branch
                  %165 = sbr.rel (%p163) target = $region58
                $region55: #{tif_forward.1} parent=50 // loop_body
                  %v169 = vld [vmem:[%s167] sm:$0xff]
                  %170 = vst [vmem:[%s168] sm:$0xff] %v169
                  %v171 = vld [vmem:[%s167 + $0x20] sm:$0xff]
                  %172 = vst [vmem:[%s168 + $0x8] sm:$0xff] %v171
                $region56: #{tif_forward.1} parent=50 // loop_footer
                  %s166 = sadd.s32 1, %s162
                $region57: #{tif_forward.1} parent=50 // loop_footer_branch
                  %161 = sbr.rel target = $region53
                $region58: #{tif_forward.1} parent=50 // loop_exit
                  _
              $region51: #{tif_forward.1} parent=35 // pred_fallthru
                _
              // Predicated region
              $region59: #{tif_forward.1} parent=35 // pred_check
                _
              $region60: #{tif_forward.1} parent=35 // pred_check_branch
                %174 = sbr.rel target = $region62
              $region61: #{tif_forward.1} parent=35 // pred_region
                _
              $region62: #{tif_forward.1} parent=35 // pred_fallthru
                _
            $region36: #{tif_forward.1} parent=31 // pred_fallthru
              _
            // Predicated region
            $region37: #{tif_forward.1} parent=31 // pred_check
              _
            $region38: #{tif_forward.1} parent=31 // pred_check_branch
              %145 = sbr.rel target = $region40
            $region39: #{tif_forward.1} parent=31 // pred_region
              loop: start=0, step=1, limit=1
              $region41: #{tif_forward.1} parent=39 // loop_pre_header
                _
              $region42: #{tif_forward.1} parent=39 // loop_header
                %s148 = sphi 0, %s152
                %p149 = scmp.ge.s32.totalorder %s148, 1
                %s153 = sphi %s139, %s139
                %s154 = sphi %s137, %s137
              $region43: #{tif_forward.1} parent=39 // loop_header_branch
                %151 = sbr.rel (%p149) target = $region47
              $region44: #{tif_forward.1} parent=39 // loop_body
                %v155 = vld [vmem:[%s153] sm:$0xff]
                %156 = vst [vmem:[%s154] sm:$0xff] %v155
                %v157 = vld [vmem:[%s153 + $0x20] sm:$0xff]
                %158 = vst [vmem:[%s154 + $0x8] sm:$0xff] %v157
              $region45: #{tif_forward.1} parent=39 // loop_footer
                %s152 = sadd.s32 1, %s148
              $region46: #{tif_forward.1} parent=39 // loop_footer_branch
                %147 = sbr.rel target = $region42
              $region47: #{tif_forward.1} parent=39 // loop_exit
                _
            $region40: #{tif_forward.1} parent=31 // pred_fallthru
              _
          $region32: #{tif_forward.1} parent=27 // pred_fallthru
            _
          %175 = vnop
        $region28: #{tif_forward.1} parent=23 // pred_fallthru
          _
      $region24: #{tif_forward.1} parent=5 // pred_fallthru
        _
      %p176 = scmp.le.s32.totalorder 1, %s12
      %p177 = scmp.lt.s32.totalorder %s12, 5
      %p178 = pnand %p176, %p177
      %p179 = pneg %p178
      // Predicated region
      $region63: #{tif_forward.1} parent=5 // pred_check
        _
      $region64: #{tif_forward.1} parent=5 // pred_check_branch
        %181 = sbr.rel (%p178) target = $region66
      $region65: #{tif_forward.1} parent=5 // pred_region
        %s182 = ssub.s32 %s12, 1
        %s183 = sand.u32 %s25, 1
        %s184 = sand.u32 %s25, 1
        %s185 = smul.addr %s184, 16
        %s186 = scalar_lea.vmem [#allocation2], %s185
        // Predicated region
        $region67: #{tif_forward.1} parent=65 // pred_check
          %p187 = pneg %p38
        $region68: #{tif_forward.1} parent=65 // pred_check_branch
          %189 = sbr.rel (%p187) target = $region70
        $region69: #{tif_forward.1} parent=65 // pred_region
          _
        $region70: #{tif_forward.1} parent=65 // pred_fallthru
          _
        %s190 = sand.u32 %s25, 1
        %s191 = sand.u32 %s25, 1
        %s192 = smul.addr %s191, 16
        %s193 = scalar_lea.vmem [#allocation2], %s192
        %p194 = pneg %p38
        %p195 = pneg %p35
        %p196 = pneg %p59
        %p197 = pneg %p56
        %p198 = pneg %p80
        %p199 = pneg %p77
        %p200 = pneg %p106
        %p201 = pneg %p103
        %s202 = sand.u32 %s93, 1
        %s203 = scalar_lea.sflag [#allocation4], %s202
        %s204 = sand.u32 %s93, 1
        %s205 = smul.addr %s204, 16
        %s206 = scalar_lea.vmem [#allocation3], %s205
        %v207 = vld [vmem:[%s186] sm:$0xff]
        %v208 = vld [vmem:[%s186 + $0x8] sm:$0xff]
        %v209 = vld [vmem:[%s1] sm:$0xff]
        %v210 = vld [vmem:[%s1 + $0x8] sm:$0xff]
        %v211 = vld [vmem:[%s1 + $0x10] sm:$0xff]
        %v212 = vld [vmem:[%s1 + $0x18] sm:$0xff]
        %v213 = vld [vmem:[%s1 + $0x20] sm:$0xff]
        %v214 = vld [vmem:[%s1 + $0x28] sm:$0xff]
        %v215 = vld [vmem:[%s1 + $0x30] sm:$0xff]
        %v216 = vld [vmem:[%s1 + $0x38] sm:$0xff]
        %v217 = vld [vmem:[%s1 + $0x40] sm:$0xff]
        %v218 = vld [vmem:[%s1 + $0x48] sm:$0xff]
        %v219 = vld [vmem:[%s1 + $0x50] sm:$0xff]
        %v220 = vld [vmem:[%s1 + $0x58] sm:$0xff]
        %v221 = vld [vmem:[%s1 + $0x60] sm:$0xff]
        %v222 = vld [vmem:[%s1 + $0x68] sm:$0xff]
        %v223 = vld [vmem:[%s1 + $0x70] sm:$0xff]
        %v224 = vld [vmem:[%s1 + $0x78] sm:$0xff]
        %v225 = vld [vmem:[%s2] sm:$0xff]
        %v226 = vld [vmem:[%s2 + $0x8] sm:$0xff]
        %v227 = vld [vmem:[%s2 + $0x10] sm:$0xff]
        %v228 = vld [vmem:[%s2 + $0x18] sm:$0xff]
        %v229 = vld [vmem:[%s2 + $0x20] sm:$0xff]
        %v230 = vld [vmem:[%s2 + $0x28] sm:$0xff]
        %v231 = vld [vmem:[%s2 + $0x30] sm:$0xff]
        %v232 = vld [vmem:[%s2 + $0x38] sm:$0xff]
        %v233 = vld [vmem:[%s2 + $0x40] sm:$0xff]
        %v234 = vld [vmem:[%s2 + $0x48] sm:$0xff]
        %v235 = vld [vmem:[%s2 + $0x50] sm:$0xff]
        %v236 = vld [vmem:[%s2 + $0x58] sm:$0xff]
        %v237 = vld [vmem:[%s2 + $0x60] sm:$0xff]
        %v238 = vld [vmem:[%s2 + $0x68] sm:$0xff]
        %v239 = vld [vmem:[%s2 + $0x70] sm:$0xff]
        %v240 = vld [vmem:[%s2 + $0x78] sm:$0xff]
        %241 = vmatprep.subr.mxu0 0.0
        %242 = vmatpush1.msra.mxu0 %v209
        %243 = vmatprep.subr.mxu0 0.0
        %244 = vmatpush1.msra.mxu0 %v210
        %245 = vmatprep.subr.mxu0 0.0
        %246 = vmatpush1.msra.mxu0 %v211
        %247 = vmatprep.subr.mxu0 0.0
        %248 = vmatpush1.msra.mxu0 %v212
        %249 = vmatprep.subr.mxu0 0.0
        %250 = vmatpush1.msra.mxu0 %v213
        %251 = vmatprep.subr.mxu0 0.0
        %252 = vmatpush1.msra.mxu0 %v214
        %253 = vmatprep.subr.mxu0 0.0
        %254 = vmatpush1.msra.mxu0 %v215
        %255 = vmatprep.subr.mxu0 0.0
        %256 = vmatpush1.msra.mxu0 %v216
        %257 = vmatprep.subr.mxu0 0.0
        %258 = vmatpush1.msra.mxu0 %v217
        %259 = vmatprep.subr.mxu0 0.0
        %260 = vmatpush1.msra.mxu0 %v218
        %261 = vmatprep.subr.mxu0 0.0
        %262 = vmatpush1.msra.mxu0 %v219
        %263 = vmatprep.subr.mxu0 0.0
        %264 = vmatpush1.msra.mxu0 %v220
        %265 = vmatprep.subr.mxu0 0.0
        %266 = vmatpush1.msra.mxu0 %v221
        %267 = vmatprep.subr.mxu0 0.0
        %268 = vmatpush1.msra.mxu0 %v222
        %269 = vmatprep.subr.mxu0 0.0
        %270 = vmatpush1.msra.mxu0 %v223
        %271 = vmatprep.subr.mxu0 0.0
        %272 = vmatpush1.msra.mxu0 %v224
        %273 = vmatprep.subr.mxu0 0.0
        %274 = vmatpush1.msra.mxu0 0.0
        %275 = vmatprep.subr.mxu0 0.0
        %276 = vmatpush1.msra.mxu0 0.0
        %277 = vmatprep.subr.mxu0 0.0
        %278 = vmatpush1.msra.mxu0 0.0
        %279 = vmatprep.subr.mxu0 0.0
        %280 = vmatpush1.msra.mxu0 0.0
        %281 = vmatprep.subr.mxu0 0.0
        %282 = vmatpush1.msra.mxu0 0.0
        %283 = vmatprep.subr.mxu0 0.0
        %284 = vmatpush1.msra.mxu0 0.0
        %285 = vmatprep.subr.mxu0 0.0
        %286 = vmatpush1.msra.mxu0 0.0
        %287 = vmatprep.subr.mxu0 0.0
        %288 = vmatpush1.msra.mxu0 0.0
        %289 = vmatprep.subr.mxu0 0.0
        %290 = vmatpush1.msra.mxu0 0.0
        %291 = vmatprep.subr.mxu0 0.0
        %292 = vmatpush1.msra.mxu0 0.0
        %293 = vmatprep.subr.mxu0 0.0
        %294 = vmatpush1.msra.mxu0 0.0
        %295 = vmatprep.subr.mxu0 0.0
        %296 = vmatpush1.msra.mxu0 0.0
        %297 = vmatprep.subr.mxu0 0.0
        %298 = vmatpush1.msra.mxu0 0.0
        %299 = vmatprep.subr.mxu0 0.0
        %300 = vmatpush1.msra.mxu0 0.0
        %301 = vmatprep.subr.mxu0 0.0
        %302 = vmatpush1.msra.mxu0 0.0
        %303 = vmatprep.subr.mxu0 0.0
        %304 = vmatpush1.msra.mxu0 0.0
        %305 = vmatprep.mubr.f32.mxu0 0.0
        %306 = vmatmul.mubr.f32.gmra.mrb[0].mxu0 %v207
        %v307 = vpop.f32.mrb[0].mxu0
        %v308 = vadd.f32 0.0, %v307
        %v309 = vpop.f32.mrb[0].mxu0
        %310 = vmatprep.mubr.f32.mxu0 0.0
        %311 = vmatmul.mubr.f32.gmra.mrb[0].mxu0 %v208
        %v312 = vpop.f32.mrb[0].mxu0
        %v313 = vadd.f32 0.0, %v312
        %v314 = vpop.f32.mrb[0].mxu0
        %315 = vdwg.mxu0
        %316 = vadd.xlane.f32.xlu0 %v308
        %v317 = vpop.xlane.xlu0 %316
        %318 = vadd.xlane.f32.xlu0 %v313
        %v319 = vpop.xlane.xlu0 %318
        %v320 = vadd.f32 %v317, %v319
        %v321 = vrot.slane %v320, 4
        %v322 = vadd.f32 %v320, %v321
        %v323 = vrot.slane %v322, 2
        %v324 = vadd.f32 %v322, %v323
        %v325 = vrot.slane %v324, 1
        %v326 = vadd.f32 %v324, %v325
        %v327 = vmul.f32 %v308, %v308
        %v328 = vmul.f32 %v313, %v313
        %329 = vadd.xlane.f32.xlu0 %v327
        %v330 = vpop.xlane.xlu0 %329
        %331 = vadd.xlane.f32.xlu0 %v328
        %v332 = vpop.xlane.xlu0 %331
        %v333 = vadd.f32 %v330, %v332
        %v334 = vrot.slane %v333, 4
        %v335 = vadd.f32 %v333, %v334
        %v336 = vrot.slane %v335, 2
        %v337 = vadd.f32 %v335, %v336
        %v338 = vrot.slane %v337, 1
        %v339 = vadd.f32 %v337, %v338
        %v340 = vrcp.pop 256.0
        %v341 = vmul.f32 %v326, %v340
        %v342 = vmul.f32 %v339, %v340
        %v343 = vmul.f32 %v341, %v341
        %v344 = vsub.f32 %v342, %v343
        %v345 = vsub.f32 %v308, %v341
        %v346 = vsub.f32 %v313, %v341
        %v347 = vadd.f32 %v344, 1e-05
        %v348 = vrsqrt.pop %v347
        %v349 = vmul.f32 %v345, %v348
        %v350 = vmul.f32 %v346, %v348
        %v351 = vmax.f32 %v349, 0.0
        %v352 = vmax.f32 %v350, 0.0
        %353 = vmatprep.subr.mxu0 0.0
        %354 = vmatpush1.msra.mxu0 %v225
        %355 = vmatprep.subr.mxu0 0.0
        %356 = vmatpush1.msra.mxu0 %v226
        %357 = vmatprep.subr.mxu0 0.0
        %358 = vmatpush1.msra.mxu0 %v227
        %359 = vmatprep.subr.mxu0 0.0
        %360 = vmatpush1.msra.mxu0 %v228
        %361 = vmatprep.subr.mxu0 0.0
        %362 = vmatpush1.msra.mxu0 %v229
        %363 = vmatprep.subr.mxu0 0.0
        %364 = vmatpush1.msra.mxu0 %v230
        %365 = vmatprep.subr.mxu0 0.0
        %366 = vmatpush1.msra.mxu0 %v231
        %367 = vmatprep.subr.mxu0 0.0
        %368 = vmatpush1.msra.mxu0 %v232
        %369 = vmatprep.subr.mxu0 0.0
        %370 = vmatpush1.msra.mxu0 %v233
        %371 = vmatprep.subr.mxu0 0.0
        %372 = vmatpush1.msra.mxu0 %v234
        %373 = vmatprep.subr.mxu0 0.0
        %374 = vmatpush1.msra.mxu0 %v235
        %375 = vmatprep.subr.mxu0 0.0
        %376 = vmatpush1.msra.mxu0 %v236
        %377 = vmatprep.subr.mxu0 0.0
        %378 = vmatpush1.msra.mxu0 %v237
        %379 = vmatprep.subr.mxu0 0.0
        %380 = vmatpush1.msra.mxu0 %v238
        %381 = vmatprep.subr.mxu0 0.0
        %382 = vmatpush1.msra.mxu0 %v239
        %383 = vmatprep.subr.mxu0 0.0
        %384 = vmatpush1.msra.mxu0 %v240
        %385 = vmatprep.subr.mxu0 0.0
        %386 = vmatpush1.msra.mxu0 0.0
        %387 = vmatprep.subr.mxu0 0.0
        %388 = vmatpush1.msra.mxu0 0.0
        %389 = vmatprep.subr.mxu0 0.0
        %390 = vmatpush1.msra.mxu0 0.0
        %391 = vmatprep.subr.mxu0 0.0
        %392 = vmatpush1.msra.mxu0 0.0
        %393 = vmatprep.subr.mxu0 0.0
        %394 = vmatpush1.msra.mxu0 0.0
        %395 = vmatprep.subr.mxu0 0.0
        %396 = vmatpush1.msra.mxu0 0.0
        %397 = vmatprep.subr.mxu0 0.0
        %398 = vmatpush1.msra.mxu0 0.0
        %399 = vmatprep.subr.mxu0 0.0
        %400 = vmatpush1.msra.mxu0 0.0
        %401 = vmatprep.subr.mxu0 0.0
        %402 = vmatpush1.msra.mxu0 0.0
        %403 = vmatprep.subr.mxu0 0.0
        %404 = vmatpush1.msra.mxu0 0.0
        %405 = vmatprep.subr.mxu0 0.0
        %406 = vmatpush1.msra.mxu0 0.0
        %407 = vmatprep.subr.mxu0 0.0
        %408 = vmatpush1.msra.mxu0 0.0
        %409 = vmatprep.subr.mxu0 0.0
        %410 = vmatpush1.msra.mxu0 0.0
        %411 = vmatprep.subr.mxu0 0.0
        %412 = vmatpush1.msra.mxu0 0.0
        %413 = vmatprep.subr.mxu0 0.0
        %414 = vmatpush1.msra.mxu0 0.0
        %415 = vmatprep.subr.mxu0 0.0
        %416 = vmatpush1.msra.mxu0 0.0
        %417 = vmatprep.mubr.f32.mxu0 0.0
        %418 = vmatmul.mubr.f32.gmra.mrb[0].mxu0 %v351
        %v419 = vpop.f32.mrb[0].mxu0
        %v420 = vadd.f32 0.0, %v419
        %v421 = vpop.f32.mrb[0].mxu0
        %422 = vmatprep.mubr.f32.mxu0 0.0
        %423 = vmatmul.mubr.f32.gmra.mrb[0].mxu0 %v352
        %v424 = vpop.f32.mrb[0].mxu0
        %v425 = vadd.f32 0.0, %v424
        %v426 = vpop.f32.mrb[0].mxu0
        %427 = vdwg.mxu0
        %428 = vadd.xlane.f32.xlu0 %v420
        %v429 = vpop.xlane.xlu0 %428
        %430 = vadd.xlane.f32.xlu0 %v425
        %v431 = vpop.xlane.xlu0 %430
        %v432 = vadd.f32 %v429, %v431
        %v433 = vrot.slane %v432, 4
        %v434 = vadd.f32 %v432, %v433
        %v435 = vrot.slane %v434, 2
        %v436 = vadd.f32 %v434, %v435
        %v437 = vrot.slane %v436, 1
        %v438 = vadd.f32 %v436, %v437
        %v439 = vmul.f32 %v420, %v420
        %v440 = vmul.f32 %v425, %v425
        %441 = vadd.xlane.f32.xlu0 %v439
        %v442 = vpop.xlane.xlu0 %441
        %443 = vadd.xlane.f32.xlu0 %v440
        %v444 = vpop.xlane.xlu0 %443
        %v445 = vadd.f32 %v442, %v444
        %v446 = vrot.slane %v445, 4
        %v447 = vadd.f32 %v445, %v446
        %v448 = vrot.slane %v447, 2
        %v449 = vadd.f32 %v447, %v448
        %v450 = vrot.slane %v449, 1
        %v451 = vadd.f32 %v449, %v450
        %v452 = vrcp.pop 512.0
        %v453 = vmul.f32 %v438, %v452
        %v454 = vmul.f32 %v451, %v452
        %v455 = vmul.f32 %v453, %v453
        %v456 = vsub.f32 %v454, %v455
        %v457 = vsub.f32 %v420, %v453
        %v458 = vsub.f32 %v425, %v453
        %v459 = vadd.f32 %v456, 1e-05
        %v460 = vrsqrt.pop %v459
        %v461 = vmul.f32 %v457, %v460
        %v462 = vmul.f32 %v458, %v460
        %v463 = vmax.f32 %v461, 0.0
        %v464 = vmax.f32 %v462, 0.0
        %465 = vst [vmem:[%s206] sm:$0xff] %v463
        %466 = vst [vmem:[%s206 + $0x8] sm:$0xff] %v464
        %s467 = sand.u32 %s93, 1
        %s468 = scalar_lea.sflag [#allocation4], %s467
        %s469 = sand.u32 %s93, 1
        %s470 = smul.addr %s469, 16
        %s471 = scalar_lea.vmem [#allocation3], %s470
        // Predicated region
        $region71: #{tif_forward.1} parent=65 // pred_check
          %p472 = pneg %p103
        $region72: #{tif_forward.1} parent=65 // pred_check_branch
          %474 = sbr.rel (%p472) target = $region74
        $region73: #{tif_forward.1} parent=65 // pred_region
          %s476 = ssub.s32 256, 256
          %477 = vsyncadd %s468, %s476
          %s478 = smul.addr %s17, 128
          %s479 = scalar_lea.hbm %s3, %s478
          %s480 = sshll.u32 %s471, 4
          %s481 = int_to_ptr.vmem [resolvable:$true] %s480
          %486 = dma.vmem_to_hbm [thread:$0]  %s481, 256, %s479, %s468, 128, 512, 8
        $region74: #{tif_forward.1} parent=65 // pred_fallthru
          _
      $region66: #{tif_forward.1} parent=5 // pred_fallthru
        _
      %p487 = scmp.le.s32.totalorder 2, %s12
      // Predicated region
      $region75: #{tif_forward.1} parent=5 // pred_check
        %p488 = pneg %p487
      $region76: #{tif_forward.1} parent=5 // pred_check_branch
        %490 = sbr.rel (%p488) target = $region78
      $region77: #{tif_forward.1} parent=5 // pred_region
        %s491 = ssub.s32 %s12, 2
        // Predicated region
        $region79: #{tif_forward.1} parent=77 // pred_check
          %p492 = pneg %p109
        $region80: #{tif_forward.1} parent=77 // pred_check_branch
          %494 = sbr.rel (%p492) target = $region82
        $region81: #{tif_forward.1} parent=77 // pred_region
          %s495 = sand.u32 %s94, 1
          %s496 = scalar_lea.sflag [#allocation4], %s495
          %s497 = sand.u32 %s94, 1
          %s498 = smul.addr %s497, 16
          %s499 = scalar_lea.vmem [#allocation3], %s498
          %500 = dma.done %s496, 256
        $region82: #{tif_forward.1} parent=77 // pred_fallthru
          _
      $region78: #{tif_forward.1} parent=5 // pred_fallthru
        _
    $region6: #{tif_forward.1} parent=1 // loop_footer
      %s16 = sadd.s32 1, %s12
    $region7: #{tif_forward.1} parent=1 // loop_footer_branch
      %11 = sbr.rel target = $region3
    $region8: #{tif_forward.1} parent=1 // loop_exit
      _
    %501 = vsyncpa [#allocation4], 1
    %s502 = scalar_lea.sflag [#allocation4], 1
    %503 = vsyncpa %s502, 1

</llo_original>
